<compile_context>
chip_gen: v7x
topology: tpu7x:2x2x1
jax: 0.10.0
libtpu: 0.0.40
codegen_flags: <defaults>
</compile_context>

<pallas_src>
import functools

import jax
import jax.numpy as jnp
from jax.experimental import pallas as pl
from jax.experimental.pallas import tpu as pltpu

_LANE = 128         # lanes (fast axis)
_ACC_SUB = 8        # sublanes of the accumulator tiles
_ALIGN_SUB = 32     # int8-friendly row alignment (int8 native tile = (32, 128))
_BLOCK_ROWS = 2048  # rows of 128 lanes per grid step (1 MiB f32 + 256 KiB int8)
_N_STATS = 5        # n_pos, n_neg, n_hard, sum_pos(d^2), sum_neg(clamp^2)


def _stats_kernel(data_ref, labels_ref, out_ref, *, margin, ignore_index,
                  total_rows, block_rows, blocks_per_core, needs_mask):
    """Accumulate per-(sublane, lane) partial sums of the 5 statistics."""
    b = pl.program_id(1)

    @pl.when(b == 0)
    def _():
        out_ref[...] = jnp.zeros_like(out_ref)

    d = data_ref[...]                                # (block_rows, 128) f32
    lab = labels_ref[...].astype(jnp.float32)        # int8 {-1,0,1} -> f32

    if needs_mask:
        # Mask logical rows that fall beyond the real array (ragged trailing
        # block, or clamped/replayed blocks from the core split).
        c = pl.program_id(0)
        start_row = (c * blocks_per_core + b) * block_rows
        row = jax.lax.broadcasted_iota(jnp.int32, lab.shape, 0) + start_row
        lab = jnp.where(row < total_rows, lab, jnp.float32(ignore_index))

    zero = jnp.zeros_like(d)

    # labels in {-1 (ignore), 0 (neg), 1 (pos)}: pure-VPU selectors.
    posf = jnp.maximum(lab, 0.0)                     # 1 iff label == 1
    negf = 1.0 - lab * lab                           # 1 iff label == 0
    hardf = jnp.where(d < margin, negf, zero)        # hard negatives (d < margin)

    d2 = d * d
    clamp = jnp.maximum(margin - d, 0.0)
    c2 = clamp * clamp

    s_pos_v = posf * d2
    s_hard_v = negf * c2                             # non-hard negatives give 0

    # Fold (block_rows, 128) -> (8, 128) with pure VPU vreg adds (reduction
    # over the major axis only; no XLU, no cross-lane work in the loop).
    g = block_rows // _ACC_SUB

    def red(x):
        return jnp.sum(x.reshape(g, _ACC_SUB, _LANE), axis=0)

    out_ref[0] += red(posf)
    out_ref[1] += red(negf)
    out_ref[2] += red(hardf)
    out_ref[3] += red(s_pos_v)
    out_ref[4] += red(s_hard_v)


def contrastive_loss(data, labels, *, margin=1.0, has_miner=True, ignore_index=-1):
    """Pallas-backed equivalent of ContrastiveLoss.forward (miner_v3 path)."""
    d = data.reshape(-1).astype(jnp.float32)
    l = labels.reshape(-1).astype(jnp.int8)          # labels are {-1, 0, 1}
    n = d.shape[0]

    # Pad only when the element count is not already (32*128)-aligned; padded
    # labels are ignore_index so they never contribute.
    align = _ALIGN_SUB * _LANE
    if n % align != 0:
        pad = align - n % align
        d = jnp.pad(d, (0, pad))
        l = jnp.pad(l, (0, pad), constant_values=ignore_index)
        n = n + pad

    rows = n // _LANE                                # multiple of 32
    block_rows = min(_BLOCK_ROWS, rows)              # multiple of 32
    n_blocks = (rows + block_rows - 1) // block_rows
    ncores = 2 if n_blocks >= 2 else 1               # v7x megacore split
    blocks_per_core = (n_blocks + ncores - 1) // ncores
    needs_mask = (rows % block_rows != 0) or (blocks_per_core * ncores != n_blocks)

    d2 = d.reshape(rows, _LANE)
    l2 = l.reshape(rows, _LANE)

    def row_block(c, b):
        gb = c * blocks_per_core + b
        gb = jnp.minimum(gb, n_blocks - 1)           # clamp; replayed rows masked
        return (gb, 0)

    kernel = functools.partial(
        _stats_kernel,
        margin=float(margin),
        ignore_index=int(ignore_index),
        total_rows=rows,
        block_rows=block_rows,
        blocks_per_core=blocks_per_core,
        needs_mask=needs_mask,
    )

    acc = pl.pallas_call(
        kernel,
        out_shape=jax.ShapeDtypeStruct((ncores, _N_STATS, _ACC_SUB, _LANE),
                                       jnp.float32),
        grid_spec=pltpu.PrefetchScalarGridSpec(
            num_scalar_prefetch=0,
            grid=(ncores, blocks_per_core),
            in_specs=[
                pl.BlockSpec((block_rows, _LANE), row_block),
                pl.BlockSpec((block_rows, _LANE), row_block),
            ],
            out_specs=pl.BlockSpec((None, _N_STATS, _ACC_SUB, _LANE),
                                   lambda c, b: (c, 0, 0, 0)),
        ),
        compiler_params=pltpu.CompilerParams(
            dimension_semantics=("parallel", "arbitrary")),
    )(d2, l2)

    # Final tiny reductions + branchy weight logic in plain JAX.
    stats = acc.sum(axis=(0, 2, 3))                  # (5,)
    n_pos, n_neg, n_hard, s_pos, s_hard = (stats[0], stats[1], stats[2],
                                           stats[3], stats[4])

    # miner_v3 found hard negatives: keep all positives + hard negatives.
    tot_m = jnp.maximum(n_pos + n_hard, 1.0)
    w0_m = 1.0 + n_pos / tot_m                       # weights[0]
    w1_m = 1.0 + n_hard / tot_m                      # weights[1]
    loss_miner = (w1_m * s_pos + w0_m * s_hard) / tot_m

    # no hard negatives (s_hard == 0 there): class-count weights over all valid.
    tot_f = jnp.maximum(n_pos + n_neg, 1.0)
    w0_f = 1.0 + n_pos / tot_f
    w1_f = 1.0 + n_neg / tot_f
    loss_fallback = (w1_f * s_pos + w0_f * s_hard) / tot_f

    if has_miner:
        return jnp.where(n_hard > 0, loss_miner, loss_fallback)

    # has_miner=False: weights [1.0, 1.0], mean over all valid entries.
    return (s_pos + s_hard) / tot_f


def _reference(data, labels, *, margin=1.0, has_miner=True, ignore_index=-1):
    """Plain-JAX re-derivation of the PyTorch forward (for a sanity check)."""
    d = data.reshape(-1).astype(jnp.float32)
    l = labels.reshape(-1).astype(jnp.int32)
    valid = l != ignore_index
    pos = valid & (l == 1)
    neg = valid & (l == 0)
    hard = neg & (d < margin)
    clamp = jnp.maximum(margin - d, 0.0)
    n_pos = jnp.sum(pos.astype(jnp.float32))
    n_neg = jnp.sum(neg.astype(jnp.float32))
    n_hard = jnp.sum(hard.astype(jnp.float32))
    s_pos = jnp.sum(jnp.where(pos, d * d, 0.0))
    s_hard = jnp.sum(jnp.where(hard, clamp * clamp, 0.0))
    tot_f = jnp.maximum(n_pos + n_neg, 1.0)
    if has_miner:
        tot_m = jnp.maximum(n_pos + n_hard, 1.0)
        loss_m = ((1.0 + n_hard / tot_m) * s_pos
                  + (1.0 + n_pos / tot_m) * s_hard) / tot_m
        loss_f = ((1.0 + n_neg / tot_f) * s_pos
                  + (1.0 + n_pos / tot_f) * s_hard) / tot_f
        return jnp.where(n_hard > 0, loss_m, loss_f)
    return (s_pos + s_hard) / tot_f


if __name__ == "__main__":
    key = jax.random.PRNGKey(0)
    k_data, k_lab = jax.random.split(key)

    # data: distances in [0, 2); labels in {-1 (ignore), 0 (neg), 1 (pos)}
    data = jax.random.uniform(k_data, (2, 1, 16, 16), jnp.float32, 0.0, 2.0)
    labels = jax.random.randint(k_lab, (2, 16, 16), -1, 2, jnp.int32)

    loss_m = contrastive_loss(data, labels, margin=1.0, has_miner=True,
                              ignore_index=-1)
    loss_nm = contrastive_loss(data, labels, margin=1.0, has_miner=False,
                               ignore_index=-1)
    jax.block_until_ready((loss_m, loss_nm))

    ref_m = _reference(data, labels, margin=1.0, has_miner=True, ignore_index=-1)
    ref_nm = _reference(data, labels, margin=1.0, has_miner=False, ignore_index=-1)
    assert jnp.allclose(loss_m, ref_m, rtol=1e-4, atol=1e-5)
    assert jnp.allclose(loss_nm, ref_nm, rtol=1e-4, atol=1e-5)

    print("KERNEL_OK")
</pallas_src>

<mosaic_0001>
module attributes {stable_mosaic.version = 11 : i64} {
  func.func @_stats_kernel(%arg0: i32, %arg1: i32, %arg2: memref<32x128xf32, #tpu.memory_space<vmem>>, %arg3: memref<32x128xi8, #tpu.memory_space<vmem>>, %arg4: memref<1x5x8x128xf32, #tpu.memory_space<vmem>>) attributes {dimension_semantics = [#tpu.dimension_semantics<parallel>, #tpu.dimension_semantics<arbitrary>], iteration_bounds = array<i64: 1, 1>, scalar_prefetch = 0 : i64, scratch_operands = 0 : i64, tpu.core_type = #tpu.core_type<tc>, window_params = [{transform_indices = @transform_0, window_bounds = array<i64: 32, 128>}, {transform_indices = @transform_1, window_bounds = array<i64: 32, 128>}, {transform_indices = @transform_2, window_bounds = array<i64: 1, 5, 8, 128>}]} {
    %c0_i32 = arith.constant 0 : i32
    %0 = arith.cmpi eq, %arg1, %c0_i32 : i32
    %1 = arith.extui %0 : i1 to i32
    %c0_i32_0 = arith.constant 0 : i32
    %2 = arith.cmpi ne, %1, %c0_i32_0 : i32
    scf.if %2 {
      %cst_50 = arith.constant 0.000000e+00 : f32
      %63 = vector.broadcast %cst_50 : f32 to vector<5x8x128xf32>
      %c0_51 = arith.constant 0 : index
      %c0_52 = arith.constant 0 : index
      %c0_53 = arith.constant 0 : index
      %c0_54 = arith.constant 0 : index
      %64 = vector.load %arg4[%c0_51, %c0_52, %c0_53, %c0_54] : memref<1x5x8x128xf32, #tpu.memory_space<vmem>>, vector<1x5x8x128xf32>
      %65 = vector.shape_cast %64 : vector<1x5x8x128xf32> to vector<5x8x128xf32>
      %66 = vector.shape_cast %63 : vector<5x8x128xf32> to vector<1x5x8x128xf32>
      tpu.vector_store %arg4[%c0_51, %c0_52, %c0_53, %c0_54], %66 {strides = array<i32>} : memref<1x5x8x128xf32, #tpu.memory_space<vmem>>, vector<1x5x8x128xf32>,
    } else {
    }
    %c0 = arith.constant 0 : index
    %c0_1 = arith.constant 0 : index
    %3 = vector.load %arg2[%c0, %c0_1] : memref<32x128xf32, #tpu.memory_space<vmem>>, vector<32x128xf32>
    %c0_2 = arith.constant 0 : index
    %c0_3 = arith.constant 0 : index
    %4 = vector.load %arg3[%c0_2, %c0_3] : memref<32x128xi8, #tpu.memory_space<vmem>>, vector<32x128xi8>
    %5 = arith.sitofp %4 : vector<32x128xi8> to vector<32x128xf32>
    %cst = arith.constant 0.000000e+00 : f32
    %6 = vector.broadcast %cst : f32 to vector<32x128xf32>
    %cst_4 = arith.constant 0.000000e+00 : f32
    %7 = vector.broadcast %cst_4 : f32 to vector<32x128xf32>
    %8 = arith.maximumf %5, %7 : vector<32x128xf32>
    %9 = arith.mulf %5, %5 : vector<32x128xf32>
    %cst_5 = arith.constant 1.000000e+00 : f32
    %10 = vector.broadcast %cst_5 : f32 to vector<32x128xf32>
    %11 = arith.subf %10, %9 : vector<32x128xf32>
    %cst_6 = arith.constant 1.000000e+00 : f32
    %12 = vector.broadcast %cst_6 : f32 to vector<32x128xf32>
    %13 = arith.cmpf olt, %3, %12 : vector<32x128xf32>
    %14 = arith.select %13, %11, %6 : vector<32x128xi1>, vector<32x128xf32>
    %15 = arith.mulf %3, %3 : vector<32x128xf32>
    %cst_7 = arith.constant 1.000000e+00 : f32
    %16 = vector.broadcast %cst_7 : f32 to vector<32x128xf32>
    %17 = arith.subf %16, %3 : vector<32x128xf32>
    %cst_8 = arith.constant 0.000000e+00 : f32
    %18 = vector.broadcast %cst_8 : f32 to vector<32x128xf32>
    %19 = arith.maximumf %17, %18 : vector<32x128xf32>
    %20 = arith.mulf %19, %19 : vector<32x128xf32>
    %21 = arith.mulf %8, %15 : vector<32x128xf32>
    %22 = arith.mulf %11, %20 : vector<32x128xf32>
    %c0_9 = arith.constant 0 : index
    %c0_10 = arith.constant 0 : index
    %c0_11 = arith.constant 0 : index
    %c0_12 = arith.constant 0 : index
    %23 = vector.load %arg4[%c0_9, %c0_10, %c0_11, %c0_12] : memref<1x5x8x128xf32, #tpu.memory_space<vmem>>, vector<1x1x8x128xf32>
    %24 = vector.shape_cast %23 : vector<1x1x8x128xf32> to vector<8x128xf32>
    %25 = vector.shape_cast %8 : vector<32x128xf32> to vector<4x8x128xf32>
    %cst_13 = arith.constant dense<0.000000e+00> : vector<8x128xf32>
    %26 = vector.multi_reduction <add>, %25, %cst_13 [0] : vector<4x8x128xf32> to vector<8x128xf32>
    %27 = arith.addf %24, %26 : vector<8x128xf32>
    %c0_14 = arith.constant 0 : index
    %c0_15 = arith.constant 0 : index
    %c0_16 = arith.constant 0 : index
    %c0_17 = arith.constant 0 : index
    %28 = vector.load %arg4[%c0_14, %c0_15, %c0_16, %c0_17] : memref<1x5x8x128xf32, #tpu.memory_space<vmem>>, vector<1x1x8x128xf32>
    %29 = vector.shape_cast %28 : vector<1x1x8x128xf32> to vector<8x128xf32>
    %30 = vector.shape_cast %27 : vector<8x128xf32> to vector<1x1x8x128xf32>
    tpu.vector_store %arg4[%c0_14, %c0_15, %c0_16, %c0_17], %30 {strides = array<i32>} : memref<1x5x8x128xf32, #tpu.memory_space<vmem>>, vector<1x1x8x128xf32>,
    %c0_18 = arith.constant 0 : index
    %c1 = arith.constant 1 : index
    %c0_19 = arith.constant 0 : index
    %c0_20 = arith.constant 0 : index
    %31 = vector.load %arg4[%c0_18, %c1, %c0_19, %c0_20] : memref<1x5x8x128xf32, #tpu.memory_space<vmem>>, vector<1x1x8x128xf32>
    %32 = vector.shape_cast %31 : vector<1x1x8x128xf32> to vector<8x128xf32>
    %33 = vector.shape_cast %11 : vector<32x128xf32> to vector<4x8x128xf32>
    %cst_21 = arith.constant dense<0.000000e+00> : vector<8x128xf32>
    %34 = vector.multi_reduction <add>, %33, %cst_21 [0] : vector<4x8x128xf32> to vector<8x128xf32>
    %35 = arith.addf %32, %34 : vector<8x128xf32>
    %c0_22 = arith.constant 0 : index
    %c1_23 = arith.constant 1 : index
    %c0_24 = arith.constant 0 : index
    %c0_25 = arith.constant 0 : index
    %36 = vector.load %arg4[%c0_22, %c1_23, %c0_24, %c0_25] : memref<1x5x8x128xf32, #tpu.memory_space<vmem>>, vector<1x1x8x128xf32>
    %37 = vector.shape_cast %36 : vector<1x1x8x128xf32> to vector<8x128xf32>
    %38 = vector.shape_cast %35 : vector<8x128xf32> to vector<1x1x8x128xf32>
    tpu.vector_store %arg4[%c0_22, %c1_23, %c0_24, %c0_25], %38 {strides = array<i32>} : memref<1x5x8x128xf32, #tpu.memory_space<vmem>>, vector<1x1x8x128xf32>,
    %c0_26 = arith.constant 0 : index
    %c2 = arith.constant 2 : index
    %c0_27 = arith.constant 0 : index
    %c0_28 = arith.constant 0 : index
    %39 = vector.load %arg4[%c0_26, %c2, %c0_27, %c0_28] : memref<1x5x8x128xf32, #tpu.memory_space<vmem>>, vector<1x1x8x128xf32>
    %40 = vector.shape_cast %39 : vector<1x1x8x128xf32> to vector<8x128xf32>
    %41 = vector.shape_cast %14 : vector<32x128xf32> to vector<4x8x128xf32>
    %cst_29 = arith.constant dense<0.000000e+00> : vector<8x128xf32>
    %42 = vector.multi_reduction <add>, %41, %cst_29 [0] : vector<4x8x128xf32> to vector<8x128xf32>
    %43 = arith.addf %40, %42 : vector<8x128xf32>
    %c0_30 = arith.constant 0 : index
    %c2_31 = arith.constant 2 : index
    %c0_32 = arith.constant 0 : index
    %c0_33 = arith.constant 0 : index
    %44 = vector.load %arg4[%c0_30, %c2_31, %c0_32, %c0_33] : memref<1x5x8x128xf32, #tpu.memory_space<vmem>>, vector<1x1x8x128xf32>
    %45 = vector.shape_cast %44 : vector<1x1x8x128xf32> to vector<8x128xf32>
    %46 = vector.shape_cast %43 : vector<8x128xf32> to vector<1x1x8x128xf32>
    tpu.vector_store %arg4[%c0_30, %c2_31, %c0_32, %c0_33], %46 {strides = array<i32>} : memref<1x5x8x128xf32, #tpu.memory_space<vmem>>, vector<1x1x8x128xf32>,
    %c0_34 = arith.constant 0 : index
    %c3 = arith.constant 3 : index
    %c0_35 = arith.constant 0 : index
    %c0_36 = arith.constant 0 : index
    %47 = vector.load %arg4[%c0_34, %c3, %c0_35, %c0_36] : memref<1x5x8x128xf32, #tpu.memory_space<vmem>>, vector<1x1x8x128xf32>
    %48 = vector.shape_cast %47 : vector<1x1x8x128xf32> to vector<8x128xf32>
    %49 = vector.shape_cast %21 : vector<32x128xf32> to vector<4x8x128xf32>
    %cst_37 = arith.constant dense<0.000000e+00> : vector<8x128xf32>
    %50 = vector.multi_reduction <add>, %49, %cst_37 [0] : vector<4x8x128xf32> to vector<8x128xf32>
    %51 = arith.addf %48, %50 : vector<8x128xf32>
    %c0_38 = arith.constant 0 : index
    %c3_39 = arith.constant 3 : index
    %c0_40 = arith.constant 0 : index
    %c0_41 = arith.constant 0 : index
    %52 = vector.load %arg4[%c0_38, %c3_39, %c0_40, %c0_41] : memref<1x5x8x128xf32, #tpu.memory_space<vmem>>, vector<1x1x8x128xf32>
    %53 = vector.shape_cast %52 : vector<1x1x8x128xf32> to vector<8x128xf32>
    %54 = vector.shape_cast %51 : vector<8x128xf32> to vector<1x1x8x128xf32>
    tpu.vector_store %arg4[%c0_38, %c3_39, %c0_40, %c0_41], %54 {strides = array<i32>} : memref<1x5x8x128xf32, #tpu.memory_space<vmem>>, vector<1x1x8x128xf32>,
    %c0_42 = arith.constant 0 : index
    %c4 = arith.constant 4 : index
    %c0_43 = arith.constant 0 : index
    %c0_44 = arith.constant 0 : index
    %55 = vector.load %arg4[%c0_42, %c4, %c0_43, %c0_44] : memref<1x5x8x128xf32, #tpu.memory_space<vmem>>, vector<1x1x8x128xf32>
    %56 = vector.shape_cast %55 : vector<1x1x8x128xf32> to vector<8x128xf32>
    %57 = vector.shape_cast %22 : vector<32x128xf32> to vector<4x8x128xf32>
    %cst_45 = arith.constant dense<0.000000e+00> : vector<8x128xf32>
    %58 = vector.multi_reduction <add>, %57, %cst_45 [0] : vector<4x8x128xf32> to vector<8x128xf32>
    %59 = arith.addf %56, %58 : vector<8x128xf32>
    %c0_46 = arith.constant 0 : index
    %c4_47 = arith.constant 4 : index
    %c0_48 = arith.constant 0 : index
    %c0_49 = arith.constant 0 : index
    %60 = vector.load %arg4[%c0_46, %c4_47, %c0_48, %c0_49] : memref<1x5x8x128xf32, #tpu.memory_space<vmem>>, vector<1x1x8x128xf32>
    %61 = vector.shape_cast %60 : vector<1x1x8x128xf32> to vector<8x128xf32>
    %62 = vector.shape_cast %59 : vector<8x128xf32> to vector<1x1x8x128xf32>
    tpu.vector_store %arg4[%c0_46, %c4_47, %c0_48, %c0_49], %62 {strides = array<i32>} : memref<1x5x8x128xf32, #tpu.memory_space<vmem>>, vector<1x1x8x128xf32>,
    return
  }
  func.func @transform_0(%arg0: i32, %arg1: i32) -> (i32, i32) {
    %c1_i32 = arith.constant 1 : i32
    %0 = arith.muli %arg0, %c1_i32 : i32
    %1 = arith.addi %0, %arg1 : i32
    %c0_i32 = arith.constant 0 : i32
    %2 = arith.minsi %1, %c0_i32 : i32
    %c0_i32_0 = arith.constant 0 : i32
    %c0_i32_1 = arith.constant 0 : i32
    return %2, %c0_i32_0 : i32, i32
  }
  func.func @transform_1(%arg0: i32, %arg1: i32) -> (i32, i32) {
    %c1_i32 = arith.constant 1 : i32
    %0 = arith.muli %arg0, %c1_i32 : i32
    %1 = arith.addi %0, %arg1 : i32
    %c0_i32 = arith.constant 0 : i32
    %2 = arith.minsi %1, %c0_i32 : i32
    %c0_i32_0 = arith.constant 0 : i32
    %c0_i32_1 = arith.constant 0 : i32
    return %2, %c0_i32_0 : i32, i32
  }
  func.func @transform_2(%arg0: i32, %arg1: i32) -> (i32, i32, i32, i32) {
    %c0_i32 = arith.constant 0 : i32
    %c0_i32_0 = arith.constant 0 : i32
    %c0_i32_1 = arith.constant 0 : i32
    %c0_i32_2 = arith.constant 0 : i32
    return %arg0, %c0_i32, %c0_i32_0, %c0_i32_1 : i32, i32, i32, i32
  }
}

</mosaic_0001>

<llo_original>
// kernel: tpu_custom_call.1
$region0: #{tpu_custom_call.1}
  #allocation0 [shape = 'u32[]', space=smem, size = 0x4, offset = 0x4, fixed_abs, tag = 'smem constant byte address 0x4 - core index']
  #allocation1 [shape = 'u32[144,128]{1,0:T(1,128)}', space=vmem, size = 0x12000, scoped, tag = 'internal scratch']
  %s0 = inlined_call_operand.hbm [shape: f32[32,128], index: 0, kind: input, shape index: {}]
  %s1 = inlined_call_operand.hbm [shape: s8[32,128], index: 1, kind: input, shape index: {}]
  %s2 = inlined_call_operand.hbm [shape: f32[1,5,8,128], index: 2, kind: output, shape index: {}]
  %s3 = sld [smem:[#allocation0]]
  $region30: #{tpu_custom_call.1} parent=0
    _
  %s5 = ssub.s32 1, %s3
  %s6 = scalar_select 0, %s5, %s3
  $region1: #{tpu_custom_call.1} parent=0
    #allocation2 [shape = 'u8[16384]{0}', space=vmem, size = 0x4000, scoped, tag = 'input window, operand 0, single buffered']
    #allocation3 [shape = 's32[1]{0}', space=sflag, size = 0x4, scoped, tag = 'scoped memory for tpu_custom_call.1']
    #allocation4 [shape = 's32[1]{0}', space=sflag, size = 0x4, scoped, tag = 'scoped memory for tpu_custom_call.1']
    #allocation5 [shape = 'u8[4096]{0}', space=vmem, size = 0x1000, scoped, tag = 'input window, operand 1, single buffered']
    #allocation6 [shape = 's32[1]{0}', space=sflag, size = 0x4, scoped, tag = 'scoped memory for tpu_custom_call.1']
    #allocation7 [shape = 'u8[20480]{0}', space=vmem, size = 0x5000, scoped, tag = 'output window, operand 0, single buffered']
    %7 = vsyncpa [#allocation3], 0
    %8 = vsyncpa [#allocation6], 0
    %9 = vsyncpa [#allocation4], 0
    // Predicated region
    $region2: #{tpu_custom_call.1} parent=1 // pred_check
      _
    $region3: #{tpu_custom_call.1} parent=1 // pred_check_branch
      %11 = sbr.rel (0) target = $region5
    $region4: #{tpu_custom_call.1} parent=1 // pred_region
      %s12 = sadd.s32 0, 0
      %p13 = scmp.lt.s32.totalorder %s12, 0
      %s14 = scalar_select %p13, %s12, 0
      %s15 = smul.u32 4, %s14
      %s17 = ssub.s32 512, 512
      %18 = vsyncadd [#allocation3], %s17
      %s19 = smul.addr %s15, 128
      %s20 = scalar_lea.hbm %s0, %s19
      %s21 = sshll.u32 [#allocation2], 4
      %s22 = int_to_ptr.vmem [resolvable:$true] %s21
      %27 = dma.hbm_to_vmem [thread:$0]  %s20, 512, %s22, [#allocation3], 128, 128, 8
    $region5: #{tpu_custom_call.1} parent=1 // pred_fallthru
      _
    // Predicated region
    $region6: #{tpu_custom_call.1} parent=1 // pred_check
      _
    $region7: #{tpu_custom_call.1} parent=1 // pred_check_branch
      %29 = sbr.rel (0) target = $region9
    $region8: #{tpu_custom_call.1} parent=1 // pred_region
      %s30 = sadd.s32 0, 0
      %p31 = scmp.lt.s32.totalorder %s30, 0
      %s32 = scalar_select %p31, %s30, 0
      %s34 = ssub.s32 128, 128
      %35 = vsyncadd [#allocation6], %s34
      %s36 = smul.addr %s32, 128
      %s37 = scalar_lea.hbm %s1, %s36
      %s39 = sshll.u32 [#allocation5], 4
      %s40 = int_to_ptr.vmem [resolvable:$true] %s39
      %42 = dma.hbm_to_vmem [thread:$0]  %s37, 128, %s40, [#allocation6]
    $region9: #{tpu_custom_call.1} parent=1 // pred_fallthru
      _
    // Predicated region
    $region10: #{tpu_custom_call.1} parent=1 // pred_check
      _
    $region11: #{tpu_custom_call.1} parent=1 // pred_check_branch
      %44 = sbr.rel (0) target = $region13
    $region12: #{tpu_custom_call.1} parent=1 // pred_region
      %45 = dma.done [#allocation3], 512
    $region13: #{tpu_custom_call.1} parent=1 // pred_fallthru
      _
    // Predicated region
    $region14: #{tpu_custom_call.1} parent=1 // pred_check
      _
    $region15: #{tpu_custom_call.1} parent=1 // pred_check_branch
      %47 = sbr.rel (0) target = $region17
    $region16: #{tpu_custom_call.1} parent=1 // pred_region
      %48 = dma.done [#allocation6], 128
    $region17: #{tpu_custom_call.1} parent=1 // pred_fallthru
      _
    %s49 = sadd.s32 0, 0
    %p50 = scmp.lt.s32.totalorder %s49, 0
    %s51 = scalar_select %p50, %s49, 0
    %s52 = smul.u32 4, %s51
    %s53 = sadd.s32 0, 0
    %p54 = scmp.lt.s32.totalorder %s53, 0
    %s55 = scalar_select %p54, %s53, 0
    %p56 = scmp.eq.s32.totalorder 0, 0
    // Predicated region
    $region18: #{tpu_custom_call.1} parent=1 // pred_check
      %p57 = pneg %p56
    $region19: #{tpu_custom_call.1} parent=1 // pred_check_branch
      %59 = sbr.rel (%p57) target = $region21
    $region20: #{tpu_custom_call.1} parent=1 // pred_region
      %60 = vst [vmem:[#allocation7] sm:$0xff] 0.0
      %61 = vst [vmem:[#allocation7 + $0x8] sm:$0xff] 0.0
      %62 = vst [vmem:[#allocation7 + $0x10] sm:$0xff] 0.0
      %63 = vst [vmem:[#allocation7 + $0x18] sm:$0xff] 0.0
      %64 = vst [vmem:[#allocation7 + $0x20] sm:$0xff] 0.0
    $region21: #{tpu_custom_call.1} parent=1 // pred_fallthru
      _
    %v65 = vld [vmem:[#allocation2] sm:$0xff]
    %v66 = vld [vmem:[#allocation2 + $0x8] sm:$0xff]
    %v67 = vld [vmem:[#allocation2 + $0x10] sm:$0xff]
    %v68 = vld [vmem:[#allocation2 + $0x18] sm:$0xff]
    %v69 = vld [vmem:[#allocation5] sm:$0xff]
    %v70 = vunpack.c.0.s8 %v69
    %v71 = vunpack.c.1.s8 %v69
    %v72 = vunpack.c.2.s8 %v69
    %v73 = vunpack.c.3.s8 %v69
    %v74 = vcvt.s32.f32 %v70
    %v75 = vcvt.s32.f32 %v71
    %v76 = vcvt.s32.f32 %v72
    %v77 = vcvt.s32.f32 %v73
    %v78 = vmax.f32 %v74, 0.0
    %v79 = vmax.f32 %v75, 0.0
    %v80 = vmax.f32 %v76, 0.0
    %v81 = vmax.f32 %v77, 0.0
    %v82 = vmul.f32 %v74, %v74
    %v83 = vmul.f32 %v75, %v75
    %v84 = vmul.f32 %v76, %v76
    %v85 = vmul.f32 %v77, %v77
    %v86 = vsub.f32 1.0, %v82
    %v87 = vsub.f32 1.0, %v83
    %v88 = vsub.f32 1.0, %v84
    %v89 = vsub.f32 1.0, %v85
    %vm90 = vcmp.lt.f32.partialorder %v65, 1.0
    %vm91 = vcmp.lt.f32.partialorder %v66, 1.0
    %vm92 = vcmp.lt.f32.partialorder %v67, 1.0
    %vm93 = vcmp.lt.f32.partialorder %v68, 1.0
    %v94 = vsel %vm90, %v86, 0.0
    %v95 = vsel %vm91, %v87, 0.0
    %v96 = vsel %vm92, %v88, 0.0
    %v97 = vsel %vm93, %v89, 0.0
    %v98 = vmul.f32 %v65, %v65
    %v99 = vmul.f32 %v66, %v66
    %v100 = vmul.f32 %v67, %v67
    %v101 = vmul.f32 %v68, %v68
    %v102 = vsub.f32 1.0, %v65
    %v103 = vsub.f32 1.0, %v66
    %v104 = vsub.f32 1.0, %v67
    %v105 = vsub.f32 1.0, %v68
    %v106 = vmax.f32 %v102, 0.0
    %v107 = vmax.f32 %v103, 0.0
    %v108 = vmax.f32 %v104, 0.0
    %v109 = vmax.f32 %v105, 0.0
    %v110 = vmul.f32 %v106, %v106
    %v111 = vmul.f32 %v107, %v107
    %v112 = vmul.f32 %v108, %v108
    %v113 = vmul.f32 %v109, %v109
    %v114 = vmul.f32 %v78, %v98
    %v115 = vmul.f32 %v79, %v99
    %v116 = vmul.f32 %v80, %v100
    %v117 = vmul.f32 %v81, %v101
    %v118 = vmul.f32 %v86, %v110
    %v119 = vmul.f32 %v87, %v111
    %v120 = vmul.f32 %v88, %v112
    %v121 = vmul.f32 %v89, %v113
    %v122 = vld [vmem:[#allocation7] sm:$0xff]
    %v123 = vadd.f32 %v78, %v79
    %v124 = vadd.f32 %v123, %v80
    %v125 = vadd.f32 %v124, %v81
    %v126 = vadd.f32 %v122, %v125
    %127 = vst [vmem:[#allocation7] sm:$0xff] %v126
    %s128 = scalar_lea.vmem [#allocation7], 8
    %v129 = vld [vmem:[%s128] sm:$0xff]
    %v130 = vadd.f32 %v86, %v87
    %v131 = vadd.f32 %v130, %v88
    %v132 = vadd.f32 %v131, %v89
    %v133 = vadd.f32 %v129, %v132
    %134 = vst [vmem:[%s128] sm:$0xff] %v133
    %s135 = scalar_lea.vmem [#allocation7], 16
    %v136 = vld [vmem:[%s135] sm:$0xff]
    %v137 = vadd.f32 %v94, %v95
    %v138 = vadd.f32 %v137, %v96
    %v139 = vadd.f32 %v138, %v97
    %v140 = vadd.f32 %v136, %v139
    %141 = vst [vmem:[%s135] sm:$0xff] %v140
    %s142 = scalar_lea.vmem [#allocation7], 24
    %v143 = vld [vmem:[%s142] sm:$0xff]
    %v144 = vadd.f32 %v114, %v115
    %v145 = vadd.f32 %v144, %v116
    %v146 = vadd.f32 %v145, %v117
    %v147 = vadd.f32 %v143, %v146
    %148 = vst [vmem:[%s142] sm:$0xff] %v147
    %s149 = scalar_lea.vmem [#allocation7], 32
    %v150 = vld [vmem:[%s149] sm:$0xff]
    %v151 = vadd.f32 %v118, %v119
    %v152 = vadd.f32 %v151, %v120
    %v153 = vadd.f32 %v152, %v121
    %v154 = vadd.f32 %v150, %v153
    %155 = vst [vmem:[%s149] sm:$0xff] %v154
    // Predicated region
    $region22: #{tpu_custom_call.1} parent=1 // pred_check
      _
    $region23: #{tpu_custom_call.1} parent=1 // pred_check_branch
      %157 = sbr.rel (0) target = $region25
    $region24: #{tpu_custom_call.1} parent=1 // pred_region
      %s159 = ssub.s32 640, 640
      %160 = vsyncadd [#allocation4], %s159
      %s161 = sshll.u32 [#allocation7], 4
      %s162 = int_to_ptr.vmem [resolvable:$true] %s161
      %167 = dma.vmem_to_hbm [thread:$0]  %s162, 640, %s2, [#allocation4], 128, 128, 8
    $region25: #{tpu_custom_call.1} parent=1 // pred_fallthru
      _
    // Predicated region
    $region26: #{tpu_custom_call.1} parent=1 // pred_check
      _
    $region27: #{tpu_custom_call.1} parent=1 // pred_check_branch
      %169 = sbr.rel (0) target = $region29
    $region28: #{tpu_custom_call.1} parent=1 // pred_region
      %170 = dma.done [#allocation4], 640
    $region29: #{tpu_custom_call.1} parent=1 // pred_fallthru
      _
    %171 = vsyncpa [#allocation3], 1
    %172 = vsyncpa [#allocation6], 1
    %173 = vsyncpa [#allocation4], 1

</llo_original>
